<compile_context>
chip_gen: v6e
topology: v6e:2x2x1
jax: 0.10.0
libtpu: 0.0.40
codegen_flags: <defaults>
</compile_context>

<pallas_src>
import functools

import jax
import jax.numpy as jnp
from jax import lax
from jax.experimental import pallas as pl
from jax.experimental.pallas import tpu as pltpu


# ---------------------------------------------------------------------------
# Fused Pallas kernel: per grid step, B_tile samples of
#   conv (lane-dense MXU matmul) + InstanceNorm2d(affine=False) + ReLU
# ---------------------------------------------------------------------------
def _fused_conv_instnorm_relu_kernel(p_ref, w_ref, o_ref, *, batch_tile):
    #   p_ref: [B_tile, K_pad, HW]   bf16  im2col patches (K on sublanes, HW on lanes)
    #   w_ref: [Cout,  K_pad]        bf16  flattened conv weight (zero-padded along K)
    #   o_ref: [B_tile, Cout, HW]    out dtype, lane-dense (HW multiple of 128)
    w = w_ref[...]  # hoisted once; stays live across the unrolled sample loop

    def per_sample(b, carry):
        # Conv as matmul: [Cout, K_pad] @ [K_pad, HW] -> [Cout, HW], f32 accumulation.
        y = jnp.dot(w, p_ref[b], preferred_element_type=jnp.float32)

        # InstanceNorm2d semantics: per-(sample, channel) mean / biased variance over
        # the spatial (lane) axis, eps=1e-5, affine=False.  f32 math; rsqrt -> EUP.
        mean = jnp.mean(y, axis=-1, keepdims=True)
        var = jnp.mean((y - mean) ** 2, axis=-1, keepdims=True)
        yn = (y - mean) * lax.rsqrt(var + 1e-5)

        # ReLU + unmasked lane-dense store of one [Cout, HW] slab.
        o_ref[b] = jnp.maximum(yn, 0.0).astype(o_ref.dtype)
        return carry

    # Unrolled so the LLO scheduler sees the whole per-step body.
    lax.fori_loop(0, batch_tile, per_sample, 0, unroll=True)


# ---------------------------------------------------------------------------
# Wrapper: zero-pad + im2col into [N_pad, K_pad, HW] (bf16), one fused pallas_call
# ---------------------------------------------------------------------------
def conv_block_forward(x, weight, bias=None, *, stride=1, padding=1,
                       norm="instance", batch_tile=8, out_dtype=jnp.float32):
    N, Cin, H, W = x.shape
    Cout, Cin_w, Kh, Kw = weight.shape
    assert Cin == Cin_w

    if norm != "instance":
        # TODO(synk): for norm='none'/'batch' (or any affine norm) the bias must be
        # added back in-kernel; this fused kernel implements the spec config
        # (norm='instance', affine=False, activation='relu') where it is a no-op.
        raise NotImplementedError("fused kernel implements norm='instance' only")
    # Per-channel bias is exactly cancelled by InstanceNorm(affine=False):
    # mean subtraction removes it and the variance is unchanged -> drop it.
    del bias

    Ho = (H + 2 * padding - Kh) // stride + 1
    Wo = (W + 2 * padding - Kw) // stride + 1
    HW = Ho * Wo
    assert HW % 128 == 0, "lane-dense layout assumes Ho*Wo is a multiple of 128"
    K = Cin * Kh * Kw
    K_pad = ((K + 15) // 16) * 16  # bf16 sublane-packing granule

    # Batch tiling: B_tile samples per grid step (amortizes per-step overhead,
    # bigger DMAs/stores).  Pad N up to a multiple of B_tile; padded samples
    # compute zeros (no NaNs: var=0 -> rsqrt(eps) * 0) and are sliced off.
    B_tile = max(1, min(batch_tile, N))
    n_blocks = pl.cdiv(N, B_tile)
    N_pad = n_blocks * B_tile

    # --- XLA glue: zero pad + im2col directly into the transposed layout ----
    # TODO(synk): for production-sized H/W move im2col into the kernel (Kh*Kw
    # accumulating shifted-slice matmuls over a VMEM-resident padded input tile)
    # to kill the 9x HBM read inflation; at these toy sizes the patch tensor is tiny.
    xb = x.astype(jnp.bfloat16)
    xp = jnp.pad(xb, ((0, N_pad - N), (0, 0),
                      (padding, padding), (padding, padding)))
    taps = []
    for kh in range(Kh):
        for kw in range(Kw):
            taps.append(xp[:, :, kh:kh + Ho * stride:stride, kw:kw + Wo * stride:stride])
    patches = jnp.stack(taps, axis=2)            # [N_pad, Cin, Kh*Kw, Ho, Wo]
    patches = patches.reshape(N_pad, K, HW)      # K index = cin*Kh*Kw + kh*Kw + kw
    patches = jnp.pad(patches, ((0, 0), (0, K_pad - K), (0, 0)))   # [N_pad, K_pad, HW]

    # Weight flattened with the same (Cin, Kh, Kw) ordering, zero-padded along K.
    w_flat = weight.reshape(Cout, K).astype(jnp.bfloat16)
    w_flat = jnp.pad(w_flat, ((0, 0), (0, K_pad - K)))             # [Cout, K_pad]

    out_bytes = jnp.dtype(out_dtype).itemsize
    cost = pl.CostEstimate(
        flops=2 * N * Cout * K * HW,
        transcendentals=N * Cout,                       # one rsqrt per (n, c)
        bytes_accessed=(N_pad * K_pad * HW * 2 + Cout * K_pad * 2
                        + N_pad * Cout * HW * out_bytes),
    )

    kernel = functools.partial(_fused_conv_instnorm_relu_kernel, batch_tile=B_tile)

    out = pl.pallas_call(
        kernel,
        out_shape=jax.ShapeDtypeStruct((N_pad, Cout, HW), out_dtype),
        grid=(n_blocks,),
        in_specs=[
            pl.BlockSpec((B_tile, K_pad, HW), lambda i: (i, 0, 0)),
            pl.BlockSpec((Cout, K_pad), lambda i: (0, 0)),   # weight resident across grid
        ],
        out_specs=pl.BlockSpec((B_tile, Cout, HW), lambda i: (i, 0, 0)),
        compiler_params=pltpu.CompilerParams(
            # Batch(-tile) axis -> both TensorCores on v7x; no-op on v5e/v6e.
            dimension_semantics=("parallel",),
            # Explicit scoped-VMEM budget (v5e default is only 16 MiB); current
            # per-step footprint is tiny, this leaves room to grow B_tile / HW tiles.
            vmem_limit_bytes=32 * 1024 * 1024,
        ),
        cost_estimate=cost,
    )(patches, w_flat)

    # Drop batch padding; [N, Cout, HW] -> [N, Cout, Ho, Wo] is a contiguous reshape.
    return out[:N].reshape(N, Cout, Ho, Wo)


# ---------------------------------------------------------------------------
# Pure-JAX f32 reference (includes the bias add, to verify it is indeed
# cancelled by the non-affine InstanceNorm)
# ---------------------------------------------------------------------------
def conv_block_reference(x, weight, bias, *, stride=1, padding=1):
    y = lax.conv_general_dilated(
        x.astype(jnp.float32), weight.astype(jnp.float32),
        window_strides=(stride, stride),
        padding=[(padding, padding), (padding, padding)],
        dimension_numbers=("NCHW", "OIHW", "NCHW"),
    ) + bias.reshape(1, -1, 1, 1)
    mean = jnp.mean(y, axis=(2, 3), keepdims=True)
    var = jnp.mean((y - mean) ** 2, axis=(2, 3), keepdims=True)
    yn = (y - mean) / jnp.sqrt(var + 1e-5)
    return jnp.maximum(yn, 0.0)


if __name__ == "__main__":
    # ConvBlock(ndims=2, input_dim=4, output_dim=8, kernel_size=3, stride=1,
    #           bias=True, padding=1, norm='instance', activation='relu')
    N, Cin, H, W = 2, 4, 16, 16
    Cout, Kh, Kw = 8, 3, 3

    key = jax.random.PRNGKey(0)
    kx, kw_key, kb_key = jax.random.split(key, 3)

    x = jax.random.normal(kx, (N, Cin, H, W), dtype=jnp.float32)
    fan_in = Cin * Kh * Kw
    bound = 1.0 / (fan_in ** 0.5)
    weight = jax.random.uniform(kw_key, (Cout, Cin, Kh, Kw), jnp.float32, -bound, bound)
    bias = jax.random.uniform(kb_key, (Cout,), jnp.float32, -bound, bound)

    out = conv_block_forward(x, weight, bias, stride=1, padding=1)
    out = jax.block_until_ready(out)

    ref = conv_block_reference(x, weight, bias, stride=1, padding=1)
    assert out.shape == (N, Cout, H, W)
    # bf16 MXU operands (f32 accumulation) vs. an exact f32 reference:
    # expected max abs error O(1e-2) after the InstanceNorm divide.
    max_err = float(jnp.max(jnp.abs(out - ref)))
    assert max_err < 5e-2, f"mismatch vs JAX reference (max abs err {max_err})"

    print("KERNEL_OK")
</pallas_src>

<mosaic_0001>
module attributes {stable_mosaic.version = 11 : i64} {
  func.func @_fused_conv_instnorm_relu_kernel(%arg0: i32, %arg1: memref<2x48x256xbf16, #tpu.memory_space<vmem>>, %arg2: memref<8x48xbf16, #tpu.memory_space<vmem>>, %arg3: memref<2x8x256xf32, #tpu.memory_space<vmem>>) attributes {dimension_semantics = [#tpu.dimension_semantics<parallel>], iteration_bounds = array<i64: 1>, scalar_prefetch = 0 : i64, scratch_operands = 0 : i64, tpu.core_type = #tpu.core_type<tc>, window_params = [{transform_indices = @transform_0, window_bounds = array<i64: 2, 48, 256>}, {pipeline_mode = #tpu.pipeline_mode<synchronous>, transform_indices = @transform_1, window_bounds = array<i64: 8, 48>}, {transform_indices = @transform_2, window_bounds = array<i64: 2, 8, 256>}]} {
    %c0 = arith.constant 0 : index
    %c0_0 = arith.constant 0 : index
    %0 = vector.load %arg2[%c0, %c0_0] : memref<8x48xbf16, #tpu.memory_space<vmem>>, vector<8x48xbf16>
    %c0_i32 = arith.constant 0 : i32
    %1 = arith.index_cast %c0_i32 : i32 to index
    %c0_1 = arith.constant 0 : index
    %c0_2 = arith.constant 0 : index
    %2 = vector.load %arg1[%1, %c0_1, %c0_2] : memref<2x48x256xbf16, #tpu.memory_space<vmem>>, vector<1x48x256xbf16>
    %3 = vector.shape_cast %2 : vector<1x48x256xbf16> to vector<48x256xbf16>
    %cst = arith.constant dense<0.000000e+00> : vector<8x256xf32>
    %4 = tpu.matmul %0, %3, %cst {dimension_numbers = #tpu.dot_dimension_numbers<[1], [0], [0], [1], [0, 0, 1, 1], [], []>} : vector<8x48xbf16>, vector<48x256xbf16>, vector<8x256xf32> -> vector<8x256xf32>
    %cst_3 = arith.constant dense<0.000000e+00> : vector<8xf32>
    %5 = vector.multi_reduction <add>, %4, %cst_3 [1] : vector<8x256xf32> to vector<8xf32>
    %6 = vector.shape_cast %5 : vector<8xf32> to vector<8x1xf32>
    %cst_4 = arith.constant 2.560000e+02 : f32
    %7 = vector.broadcast %cst_4 : f32 to vector<8x1xf32>
    %8 = arith.divf %6, %7 : vector<8x1xf32>
    %9 = vector.broadcast %8 : vector<8x1xf32> to vector<8x256xf32>
    %10 = arith.subf %4, %9 : vector<8x256xf32>
    %11 = arith.mulf %10, %10 : vector<8x256xf32>
    %cst_5 = arith.constant dense<0.000000e+00> : vector<8xf32>
    %12 = vector.multi_reduction <add>, %11, %cst_5 [1] : vector<8x256xf32> to vector<8xf32>
    %13 = vector.shape_cast %12 : vector<8xf32> to vector<8x1xf32>
    %cst_6 = arith.constant 2.560000e+02 : f32
    %14 = vector.broadcast %cst_6 : f32 to vector<8x1xf32>
    %15 = arith.divf %13, %14 : vector<8x1xf32>
    %16 = vector.broadcast %8 : vector<8x1xf32> to vector<8x256xf32>
    %17 = arith.subf %4, %16 : vector<8x256xf32>
    %cst_7 = arith.constant 9.99999974E-6 : f32
    %18 = vector.broadcast %cst_7 : f32 to vector<8x1xf32>
    %19 = arith.addf %15, %18 : vector<8x1xf32>
    %20 = math.rsqrt %19 : vector<8x1xf32>
    %21 = vector.broadcast %20 : vector<8x1xf32> to vector<8x256xf32>
    %22 = arith.mulf %17, %21 : vector<8x256xf32>
    %cst_8 = arith.constant 0.000000e+00 : f32
    %23 = vector.broadcast %cst_8 : f32 to vector<8x256xf32>
    %24 = arith.maximumf %22, %23 : vector<8x256xf32>
    %25 = arith.index_cast %c0_i32 : i32 to index
    %c0_9 = arith.constant 0 : index
    %c0_10 = arith.constant 0 : index
    %26 = vector.load %arg3[%25, %c0_9, %c0_10] : memref<2x8x256xf32, #tpu.memory_space<vmem>>, vector<1x8x256xf32>
    %27 = vector.shape_cast %26 : vector<1x8x256xf32> to vector<8x256xf32>
    %28 = vector.shape_cast %24 : vector<8x256xf32> to vector<1x8x256xf32>
    tpu.vector_store %arg3[%25, %c0_9, %c0_10], %28 {strides = array<i32>} : memref<2x8x256xf32, #tpu.memory_space<vmem>>, vector<1x8x256xf32>,
    %c1_i32 = arith.constant 1 : i32
    %29 = arith.index_cast %c1_i32 : i32 to index
    %c0_11 = arith.constant 0 : index
    %c0_12 = arith.constant 0 : index
    %30 = vector.load %arg1[%29, %c0_11, %c0_12] : memref<2x48x256xbf16, #tpu.memory_space<vmem>>, vector<1x48x256xbf16>
    %31 = vector.shape_cast %30 : vector<1x48x256xbf16> to vector<48x256xbf16>
    %cst_13 = arith.constant dense<0.000000e+00> : vector<8x256xf32>
    %32 = tpu.matmul %0, %31, %cst_13 {dimension_numbers = #tpu.dot_dimension_numbers<[1], [0], [0], [1], [0, 0, 1, 1], [], []>} : vector<8x48xbf16>, vector<48x256xbf16>, vector<8x256xf32> -> vector<8x256xf32>
    %cst_14 = arith.constant dense<0.000000e+00> : vector<8xf32>
    %33 = vector.multi_reduction <add>, %32, %cst_14 [1] : vector<8x256xf32> to vector<8xf32>
    %34 = vector.shape_cast %33 : vector<8xf32> to vector<8x1xf32>
    %cst_15 = arith.constant 2.560000e+02 : f32
    %35 = vector.broadcast %cst_15 : f32 to vector<8x1xf32>
    %36 = arith.divf %34, %35 : vector<8x1xf32>
    %37 = vector.broadcast %36 : vector<8x1xf32> to vector<8x256xf32>
    %38 = arith.subf %32, %37 : vector<8x256xf32>
    %39 = arith.mulf %38, %38 : vector<8x256xf32>
    %cst_16 = arith.constant dense<0.000000e+00> : vector<8xf32>
    %40 = vector.multi_reduction <add>, %39, %cst_16 [1] : vector<8x256xf32> to vector<8xf32>
    %41 = vector.shape_cast %40 : vector<8xf32> to vector<8x1xf32>
    %cst_17 = arith.constant 2.560000e+02 : f32
    %42 = vector.broadcast %cst_17 : f32 to vector<8x1xf32>
    %43 = arith.divf %41, %42 : vector<8x1xf32>
    %44 = vector.broadcast %36 : vector<8x1xf32> to vector<8x256xf32>
    %45 = arith.subf %32, %44 : vector<8x256xf32>
    %cst_18 = arith.constant 9.99999974E-6 : f32
    %46 = vector.broadcast %cst_18 : f32 to vector<8x1xf32>
    %47 = arith.addf %43, %46 : vector<8x1xf32>
    %48 = math.rsqrt %47 : vector<8x1xf32>
    %49 = vector.broadcast %48 : vector<8x1xf32> to vector<8x256xf32>
    %50 = arith.mulf %45, %49 : vector<8x256xf32>
    %cst_19 = arith.constant 0.000000e+00 : f32
    %51 = vector.broadcast %cst_19 : f32 to vector<8x256xf32>
    %52 = arith.maximumf %50, %51 : vector<8x256xf32>
    %53 = arith.index_cast %c1_i32 : i32 to index
    %c0_20 = arith.constant 0 : index
    %c0_21 = arith.constant 0 : index
    %54 = vector.load %arg3[%53, %c0_20, %c0_21] : memref<2x8x256xf32, #tpu.memory_space<vmem>>, vector<1x8x256xf32>
    %55 = vector.shape_cast %54 : vector<1x8x256xf32> to vector<8x256xf32>
    %56 = vector.shape_cast %52 : vector<8x256xf32> to vector<1x8x256xf32>
    tpu.vector_store %arg3[%53, %c0_20, %c0_21], %56 {strides = array<i32>} : memref<2x8x256xf32, #tpu.memory_space<vmem>>, vector<1x8x256xf32>,
    %c2_i32 = arith.constant 2 : i32
    return
  }
  func.func @transform_0(%arg0: i32) -> (i32, i32, i32) {
    %c0_i32 = arith.constant 0 : i32
    %c0_i32_0 = arith.constant 0 : i32
    %c0_i32_1 = arith.constant 0 : i32
    return %arg0, %c0_i32, %c0_i32_0 : i32, i32, i32
  }
  func.func @transform_1(%arg0: i32) -> (i32, i32) {
    %c0_i32 = arith.constant 0 : i32
    %c0_i32_0 = arith.constant 0 : i32
    %c0_i32_1 = arith.constant 0 : i32
    return %c0_i32, %c0_i32_0 : i32, i32
  }
  func.func @transform_2(%arg0: i32) -> (i32, i32, i32) {
    %c0_i32 = arith.constant 0 : i32
    %c0_i32_0 = arith.constant 0 : i32
    %c0_i32_1 = arith.constant 0 : i32
    return %arg0, %c0_i32, %c0_i32_0 : i32, i32, i32
  }
}

</mosaic_0001>

<llo_original>
// kernel: tpu_custom_call.1
$region0: #{tpu_custom_call.1}
  #allocation0 [shape = 'u32[]', space=smem, size = 0x4, offset = 0x4, fixed_abs, tag = 'smem constant byte address 0x4 - core index']
  #allocation1 [shape = 'u32[144,128]{1,0:T(1,128)}', space=vmem, size = 0x12000, scoped, tag = 'internal scratch']
  %s0 = inlined_call_operand.hbm [shape: bf16[2,48,256], index: 0, kind: input, shape index: {}]
  %s1 = inlined_call_operand.hbm [shape: bf16[8,48], index: 1, kind: input, shape index: {}]
  %s2 = inlined_call_operand.hbm [shape: f32[2,8,256], index: 2, kind: output, shape index: {}]
  %s3 = sld [smem:[#allocation0]]
  $region26: #{tpu_custom_call.1} parent=0
    _
  %s5 = ssub.s32 1, %s3
  %s6 = scalar_select 0, %s5, %s3
  $region1: #{tpu_custom_call.1} parent=0
    #allocation2 [shape = 'u8[49152]{0}', space=vmem, size = 0xc000, scoped, tag = 'input window, operand 0, single buffered']
    #allocation3 [shape = 's32[1]{0}', space=sflag, size = 0x4, scoped, tag = 'scoped memory for tpu_custom_call.1']
    #allocation4 [shape = 's32[1]{0}', space=sflag, size = 0x4, scoped, tag = 'scoped memory for tpu_custom_call.1']
    #allocation5 [shape = 'u8[2048]{0}', space=vmem, size = 0x800, scoped, tag = 'input window, operand 1, single buffered']
    #allocation6 [shape = 's32[1]{0}', space=sflag, size = 0x4, scoped, tag = 'scoped memory for tpu_custom_call.1']
    #allocation7 [shape = 'u8[16384]{0}', space=vmem, size = 0x4000, scoped, tag = 'output window, operand 0, single buffered']
    %7 = vsyncpa [#allocation3], 0
    %8 = vsyncpa [#allocation6], 0
    %9 = vsyncpa [#allocation4], 0
    // Predicated region
    $region2: #{tpu_custom_call.1} parent=1 // pred_check
      _
    $region3: #{tpu_custom_call.1} parent=1 // pred_check_branch
      %11 = sbr.rel (0) target = $region5
    $region4: #{tpu_custom_call.1} parent=1 // pred_region
      %s13 = ssub.s32 1536, 1536
      %14 = vsyncadd [#allocation3], %s13
      %s15 = sshll.u32 [#allocation2], 4
      %s16 = int_to_ptr.vmem [resolvable:$true] %s15
      %21 = dma.hbm_to_vmem [thread:$0]  %s0, 1536, %s16, [#allocation3], 128, 128, 8
    $region5: #{tpu_custom_call.1} parent=1 // pred_fallthru
      _
    // Predicated region
    $region6: #{tpu_custom_call.1} parent=1 // pred_check
      _
    $region7: #{tpu_custom_call.1} parent=1 // pred_check_branch
      %23 = sbr.rel (0) target = $region9
    $region8: #{tpu_custom_call.1} parent=1 // pred_region
      %s25 = ssub.s32 64, 64
      %26 = vsyncadd [#allocation6], %s25
      %s28 = sshll.u32 [#allocation5], 4
      %s29 = int_to_ptr.vmem [resolvable:$true] %s28
      %31 = dma.hbm_to_vmem [thread:$0]  %s1, 64, %s29, [#allocation6]
    $region9: #{tpu_custom_call.1} parent=1 // pred_fallthru
      _
    // Predicated region
    $region10: #{tpu_custom_call.1} parent=1 // pred_check
      _
    $region11: #{tpu_custom_call.1} parent=1 // pred_check_branch
      %33 = sbr.rel (0) target = $region13
    $region12: #{tpu_custom_call.1} parent=1 // pred_region
      %34 = dma.done [#allocation3], 1536
    $region13: #{tpu_custom_call.1} parent=1 // pred_fallthru
      _
    // Predicated region
    $region14: #{tpu_custom_call.1} parent=1 // pred_check
      _
    $region15: #{tpu_custom_call.1} parent=1 // pred_check_branch
      %36 = sbr.rel (0) target = $region17
    $region16: #{tpu_custom_call.1} parent=1 // pred_region
      %37 = dma.done [#allocation6], 64
    $region17: #{tpu_custom_call.1} parent=1 // pred_fallthru
      _
    %v39 = vld [vmem:[#allocation5] sm:$0xf]
    %v40 = vld [vmem:[#allocation2] sm:$0xff]
    %v41 = vld [vmem:[#allocation2 + $0x8] sm:$0xff]
    %v42 = vld [vmem:[#allocation2 + $0x10] sm:$0xff]
    %v43 = vld [vmem:[#allocation2 + $0x18] sm:$0xff]
    %v44 = vld [vmem:[#allocation2 + $0x20] sm:$0xff]
    %v45 = vld [vmem:[#allocation2 + $0x28] sm:$0xff]
    %v52 = vunpack.c.l.b16 %v40
    %v53 = vunpack.c.h.b16 %v40
    %v54 = vunpack.c.l.b16 %v41
    %v55 = vunpack.c.h.b16 %v41
    %v56 = vunpack.c.l.b16 %v42
    %v57 = vunpack.c.h.b16 %v42
    %v58 = vunpack.c.l.b16 %v43
    %v59 = vunpack.c.h.b16 %v43
    %v60 = vunpack.c.l.b16 %v44
    %v61 = vunpack.c.h.b16 %v44
    %v62 = vunpack.c.l.b16 %v45
    %v63 = vunpack.c.h.b16 %v45
    %v64 = vpack.c.b16 %v54, %v52
    %v65 = vpack.c.b16 %v55, %v53
    %v66 = vpack.c.b16 %v58, %v56
    %v67 = vpack.c.b16 %v59, %v57
    %v68 = vpack.c.b16 %v62, %v60
    %v69 = vpack.c.b16 %v63, %v61
    %vm76 = vcmask 392192
    %v78 = vsel %vm76, %v39, 0
    %80 = vmatprep.subr.bf16.mxu0 0
    %81 = vmatpush1.bf16.msra.mxu0 0
    %82 = vmatprep.subr.bf16.mxu0 0
    %83 = vmatpush1.bf16.msra.mxu0 0
    %84 = vmatprep.subr.bf16.mxu0 0
    %85 = vmatpush1.bf16.msra.mxu0 0
    %86 = vmatprep.subr.bf16.mxu0 0
    %87 = vmatpush1.bf16.msra.mxu0 0
    %88 = vmatprep.subr.bf16.mxu0 0
    %89 = vmatpush1.bf16.msra.mxu0 0
    %90 = vmatprep.subr.bf16.mxu0 %v69
    %91 = vmatpush1.bf16.msra.mxu0 %v68
    %92 = vmatprep.subr.bf16.mxu0 %v67
    %93 = vmatpush1.bf16.msra.mxu0 %v66
    %94 = vmatprep.subr.bf16.mxu0 %v65
    %95 = vmatpush1.bf16.msra.mxu0 %v64
    %96 = vmatprep.subr.bf16.mxu0 0
    %97 = vmatpush2.bf16.msra.mxu0 0
    %98 = vmatprep.subr.bf16.mxu0 0
    %99 = vmatpush2.bf16.msra.mxu0 0
    %100 = vmatprep.subr.bf16.mxu0 0
    %101 = vmatpush2.bf16.msra.mxu0 0
    %102 = vmatprep.subr.bf16.mxu0 0
    %103 = vmatpush2.bf16.msra.mxu0 0
    %104 = vmatprep.subr.bf16.mxu0 0
    %105 = vmatpush2.bf16.msra.mxu0 0
    %106 = vmatprep.subr.bf16.mxu0 0
    %107 = vmatpush2.bf16.msra.mxu0 0
    %108 = vmatprep.subr.bf16.mxu0 0
    %109 = vmatpush2.bf16.msra.mxu0 0
    %110 = vmatprep.subr.bf16.mxu0 0
    %111 = vmatpush2.bf16.msra.mxu0 0
    %112 = vmatprep.mubr.bf16.mxu0 0
    %113 = vmatmul.mubr.bf16.gmra.mxu0 %v78
    %v114 = vpop.f32.mrf.mxu0
    %v115 = vadd.f32 0.0, %v114
    %v116 = vpop.f32.mrf.mxu0
    %v117 = vadd.f32 0.0, %v116
    %v118 = vpop.f32.mrf.mxu0
    %v119 = vpop.f32.mrf.mxu0
    %120 = vdwg.mxu0
    %v121 = vadd.f32 %v115, %v117
    %122 = vadd.xlane.f32.xlu0 %v121
    %v123 = vpop.xlane.xlu0 %122
    %v124 = vrcp.pop 256.0
    %v125 = vmul.f32 %v123, %v124
    %v126 = vsub.f32 %v115, %v125
    %v127 = vsub.f32 %v117, %v125
    %v128 = vmul.f32 %v126, %v126
    %v129 = vmul.f32 %v127, %v127
    %v130 = vadd.f32 %v128, %v129
    %131 = vadd.xlane.f32.xlu0 %v130
    %v132 = vpop.xlane.xlu0 %131
    %v133 = vmul.f32 %v132, %v124
    %v134 = vadd.f32 %v133, 1e-05
    %v135 = vrsqrt.pop %v134
    %v136 = vmul.f32 %v126, %v135
    %v137 = vmul.f32 %v127, %v135
    %v138 = vmax.f32 %v136, 0.0
    %v139 = vmax.f32 %v137, 0.0
    %140 = vst [vmem:[#allocation7] sm:$0xff] %v138
    %141 = vst [vmem:[#allocation7 + $0x8] sm:$0xff] %v139
    %s142 = scalar_lea.vmem [#allocation2], 48
    %v143 = vld [vmem:[%s142] sm:$0xff]
    %v144 = vld [vmem:[%s142 + $0x8] sm:$0xff]
    %v145 = vld [vmem:[%s142 + $0x10] sm:$0xff]
    %v146 = vld [vmem:[%s142 + $0x18] sm:$0xff]
    %v147 = vld [vmem:[%s142 + $0x20] sm:$0xff]
    %v148 = vld [vmem:[%s142 + $0x28] sm:$0xff]
    %v155 = vunpack.c.l.b16 %v143
    %v156 = vunpack.c.h.b16 %v143
    %v157 = vunpack.c.l.b16 %v144
    %v158 = vunpack.c.h.b16 %v144
    %v159 = vunpack.c.l.b16 %v145
    %v160 = vunpack.c.h.b16 %v145
    %v161 = vunpack.c.l.b16 %v146
    %v162 = vunpack.c.h.b16 %v146
    %v163 = vunpack.c.l.b16 %v147
    %v164 = vunpack.c.h.b16 %v147
    %v165 = vunpack.c.l.b16 %v148
    %v166 = vunpack.c.h.b16 %v148
    %v167 = vpack.c.b16 %v157, %v155
    %v168 = vpack.c.b16 %v158, %v156
    %v169 = vpack.c.b16 %v161, %v159
    %v170 = vpack.c.b16 %v162, %v160
    %v171 = vpack.c.b16 %v165, %v163
    %v172 = vpack.c.b16 %v166, %v164
    %179 = vmatprep.subr.bf16.mxu0 0
    %180 = vmatpush1.bf16.msra.mxu0 0
    %181 = vmatprep.subr.bf16.mxu0 0
    %182 = vmatpush1.bf16.msra.mxu0 0
    %183 = vmatprep.subr.bf16.mxu0 0
    %184 = vmatpush1.bf16.msra.mxu0 0
    %185 = vmatprep.subr.bf16.mxu0 0
    %186 = vmatpush1.bf16.msra.mxu0 0
    %187 = vmatprep.subr.bf16.mxu0 0
    %188 = vmatpush1.bf16.msra.mxu0 0
    %189 = vmatprep.subr.bf16.mxu0 %v172
    %190 = vmatpush1.bf16.msra.mxu0 %v171
    %191 = vmatprep.subr.bf16.mxu0 %v170
    %192 = vmatpush1.bf16.msra.mxu0 %v169
    %193 = vmatprep.subr.bf16.mxu0 %v168
    %194 = vmatpush1.bf16.msra.mxu0 %v167
    %195 = vmatprep.subr.bf16.mxu0 0
    %196 = vmatpush2.bf16.msra.mxu0 0
    %197 = vmatprep.subr.bf16.mxu0 0
    %198 = vmatpush2.bf16.msra.mxu0 0
    %199 = vmatprep.subr.bf16.mxu0 0
    %200 = vmatpush2.bf16.msra.mxu0 0
    %201 = vmatprep.subr.bf16.mxu0 0
    %202 = vmatpush2.bf16.msra.mxu0 0
    %203 = vmatprep.subr.bf16.mxu0 0
    %204 = vmatpush2.bf16.msra.mxu0 0
    %205 = vmatprep.subr.bf16.mxu0 0
    %206 = vmatpush2.bf16.msra.mxu0 0
    %207 = vmatprep.subr.bf16.mxu0 0
    %208 = vmatpush2.bf16.msra.mxu0 0
    %209 = vmatprep.subr.bf16.mxu0 0
    %210 = vmatpush2.bf16.msra.mxu0 0
    %211 = vmatprep.mubr.bf16.mxu0 0
    %212 = vmatmul.mubr.bf16.gmra.mxu0 %v78
    %v213 = vpop.f32.mrf.mxu0
    %v214 = vadd.f32 0.0, %v213
    %v215 = vpop.f32.mrf.mxu0
    %v216 = vadd.f32 0.0, %v215
    %v217 = vpop.f32.mrf.mxu0
    %v218 = vpop.f32.mrf.mxu0
    %219 = vdwg.mxu0
    %v220 = vadd.f32 %v214, %v216
    %221 = vadd.xlane.f32.xlu0 %v220
    %v222 = vpop.xlane.xlu0 %221
    %v223 = vmul.f32 %v222, %v124
    %v224 = vsub.f32 %v214, %v223
    %v225 = vsub.f32 %v216, %v223
    %v226 = vmul.f32 %v224, %v224
    %v227 = vmul.f32 %v225, %v225
    %v228 = vadd.f32 %v226, %v227
    %229 = vadd.xlane.f32.xlu0 %v228
    %v230 = vpop.xlane.xlu0 %229
    %v231 = vmul.f32 %v230, %v124
    %v232 = vadd.f32 %v231, 1e-05
    %v233 = vrsqrt.pop %v232
    %v234 = vmul.f32 %v224, %v233
    %v235 = vmul.f32 %v225, %v233
    %v236 = vmax.f32 %v234, 0.0
    %v237 = vmax.f32 %v235, 0.0
    %s238 = scalar_lea.vmem [#allocation7], 16
    %239 = vst [vmem:[%s238] sm:$0xff] %v236
    %240 = vst [vmem:[%s238 + $0x8] sm:$0xff] %v237
    // Predicated region
    $region18: #{tpu_custom_call.1} parent=1 // pred_check
      _
    $region19: #{tpu_custom_call.1} parent=1 // pred_check_branch
      %242 = sbr.rel (0) target = $region21
    $region20: #{tpu_custom_call.1} parent=1 // pred_region
      %s244 = ssub.s32 512, 512
      %245 = vsyncadd [#allocation4], %s244
      %s246 = sshll.u32 [#allocation7], 4
      %s247 = int_to_ptr.vmem [resolvable:$true] %s246
      %252 = dma.vmem_to_hbm [thread:$0]  %s247, 512, %s2, [#allocation4], 256, 256, 16
    $region21: #{tpu_custom_call.1} parent=1 // pred_fallthru
      _
    // Predicated region
    $region22: #{tpu_custom_call.1} parent=1 // pred_check
      _
    $region23: #{tpu_custom_call.1} parent=1 // pred_check_branch
      %254 = sbr.rel (0) target = $region25
    $region24: #{tpu_custom_call.1} parent=1 // pred_region
      %255 = dma.done [#allocation4], 512
    $region25: #{tpu_custom_call.1} parent=1 // pred_fallthru
      _
    %256 = vsyncpa [#allocation3], 1
    %257 = vsyncpa [#allocation6], 1
    %258 = vsyncpa [#allocation4], 1

</llo_original>
